<compile_context>
chip_gen: v7x
topology: tpu7x:2x2x1
jax: 0.10.0
libtpu: 0.0.40
codegen_flags: <defaults>
</compile_context>

<pallas_src>
import functools

import jax
import jax.numpy as jnp
from jax.experimental import pallas as pl
from jax.experimental.pallas import tpu as pltpu

HID_PAD = 128   # 120 -> 128
CLS_PAD = 128   # num_classes -> 128 (lane-dense output store)


def mlp_kernel(x_ref, w1_ref, b1_ref, w2_ref, b2_ref, o_ref):
    # x_ref:  (TM, 1024)      w1_ref: (1024, 128)   b1_ref: (1, 128)
    # w2_ref: (128, 128)      b2_ref: (1, 128)      o_ref:  (TM, 128)
    cdt = w1_ref.dtype  # compute dtype for MXU inputs (f32 or bf16)
    h = jnp.dot(x_ref[...].astype(cdt), w1_ref[...],
                preferred_element_type=jnp.float32)
    h = jnp.maximum(h + b1_ref[...], 0.0)                      # f32 epilogue (ReLU)
    out = jnp.dot(h.astype(cdt), w2_ref[...],
                  preferred_element_type=jnp.float32)
    o_ref[...] = (out + b2_ref[...]).astype(o_ref.dtype)


@functools.partial(jax.jit, static_argnames=("tm", "param_dtype"))
def mlp_forward(x, w1, b1, w2, b2, *, tm=512, param_dtype=jnp.float32):
    """x: (B, 1, 32, 32) float32 (NCHW). Returns (B, num_classes) float32."""
    B = x.shape[0]
    x_flat = x.reshape(B, -1)                                  # (B, 1024)
    in_dim = x_flat.shape[1]
    hid = w1.shape[1]                                          # 120
    num_classes = w2.shape[1]                                  # 10

    # ---- zero-pad params to MXU/lane friendly shapes (numerically exact:
    #      relu(0 + 0) = 0 and zero rows of w2 contribute nothing) ----
    w1_p = jnp.zeros((in_dim, HID_PAD), param_dtype).at[:, :hid].set(
        w1.astype(param_dtype))
    b1_p = jnp.zeros((1, HID_PAD), jnp.float32).at[:, :hid].set(
        b1.reshape(1, hid).astype(jnp.float32))
    w2_p = jnp.zeros((HID_PAD, CLS_PAD), param_dtype).at[:hid, :num_classes].set(
        w2.astype(param_dtype))
    b2_p = jnp.zeros((1, CLS_PAD), jnp.float32).at[:, :num_classes].set(
        b2.reshape(1, num_classes).astype(jnp.float32))

    # ---- batch tiling: TM multiple of 8 (sublane), capped for smallest VMEM ----
    TM = min(tm, max(8, pl.next_power_of_2(B)))
    grid_m = pl.cdiv(B, TM)
    B_pad = grid_m * TM
    if B_pad != B:
        x_flat = jnp.pad(x_flat, ((0, B_pad - B), (0, 0)))

    bytes_per = jnp.dtype(param_dtype).itemsize
    cost = pl.CostEstimate(
        flops=2 * B_pad * in_dim * HID_PAD + 2 * B_pad * HID_PAD * CLS_PAD,
        transcendentals=0,
        bytes_accessed=(B_pad * in_dim * 4 + B_pad * CLS_PAD * 4
                        + (in_dim * HID_PAD + HID_PAD * CLS_PAD) * bytes_per
                        + (HID_PAD + CLS_PAD) * 4),
    )

    out_padded = pl.pallas_call(
        mlp_kernel,
        out_shape=jax.ShapeDtypeStruct((B_pad, CLS_PAD), jnp.float32),
        grid=(grid_m,),
        in_specs=[
            pl.BlockSpec((TM, in_dim), lambda i: (i, 0)),        # x tile (pipelined)
            pl.BlockSpec((in_dim, HID_PAD), lambda i: (0, 0)),   # w1 (VMEM-resident)
            pl.BlockSpec((1, HID_PAD), lambda i: (0, 0)),        # b1
            pl.BlockSpec((HID_PAD, CLS_PAD), lambda i: (0, 0)),  # w2
            pl.BlockSpec((1, CLS_PAD), lambda i: (0, 0)),        # b2
        ],
        out_specs=pl.BlockSpec((TM, CLS_PAD), lambda i: (i, 0)),
        compiler_params=pltpu.CompilerParams(
            dimension_semantics=("parallel",),                   # no cross-step carry
        ),
        cost_estimate=cost,
    )(x_flat, w1_p, b1_p, w2_p, b2_p)

    # Slice padded rows / padded classes off outside the kernel.
    return out_padded[:B, :num_classes]


def init_params(key, num_classes=10):
    """Deterministic init mimicking nn.Linear's U(-1/sqrt(fan_in), 1/sqrt(fan_in))."""
    in_dim, hid = 32 * 32 * 1, 120
    k1, k2, k3, k4 = jax.random.split(key, 4)
    bound1 = 1.0 / jnp.sqrt(in_dim)
    bound2 = 1.0 / jnp.sqrt(hid)
    w1 = jax.random.uniform(k1, (in_dim, hid), jnp.float32, -bound1, bound1)
    b1 = jax.random.uniform(k2, (hid,), jnp.float32, -bound1, bound1)
    w2 = jax.random.uniform(k3, (hid, num_classes), jnp.float32, -bound2, bound2)
    b2 = jax.random.uniform(k4, (num_classes,), jnp.float32, -bound2, bound2)
    return w1, b1, w2, b2


if __name__ == "__main__":
    key = jax.random.PRNGKey(0)
    kx, kp = jax.random.split(key)

    # Input consistent with fc1 = Linear(32*32*1, 120): (B, 1, 32, 32)
    B, num_classes = 2, 10
    x = jax.random.normal(kx, (B, 1, 32, 32), jnp.float32)
    w1, b1, w2, b2 = init_params(kp, num_classes)

    # Pure-JAX reference
    x_flat = x.reshape(B, -1)
    ref = jnp.maximum(x_flat @ w1 + b1, 0.0) @ w2 + b2

    # f32 path: exact (up to f32 accumulation) vs reference.
    out = jax.block_until_ready(mlp_forward(x, w1, b1, w2, b2))
    assert out.shape == (B, num_classes)
    assert jnp.allclose(out, ref, atol=1e-5, rtol=1e-5), "f32 path mismatch"

    # bf16-weight path (halves HBM weight bytes); f32 accumulation, looser tolerance.
    out_bf16 = jax.block_until_ready(
        mlp_forward(x, w1, b1, w2, b2, param_dtype=jnp.bfloat16))
    assert out_bf16.shape == (B, num_classes)
    assert jnp.allclose(out_bf16, ref, atol=5e-2, rtol=5e-2), "bf16 path mismatch"

    print("KERNEL_OK")
</pallas_src>

<mosaic_0001>
module attributes {stable_mosaic.version = 11 : i64} {
  func.func @mlp_kernel(%arg0: i32, %arg1: memref<8x1024xf32, #tpu.memory_space<vmem>>, %arg2: memref<1024x128xf32, #tpu.memory_space<vmem>>, %arg3: memref<1x128xf32, #tpu.memory_space<vmem>>, %arg4: memref<128x128xf32, #tpu.memory_space<vmem>>, %arg5: memref<1x128xf32, #tpu.memory_space<vmem>>, %arg6: memref<8x128xf32, #tpu.memory_space<vmem>>) attributes {dimension_semantics = [#tpu.dimension_semantics<parallel>], iteration_bounds = array<i64: 1>, scalar_prefetch = 0 : i64, scratch_operands = 0 : i64, tpu.core_type = #tpu.core_type<tc>, window_params = [{transform_indices = @transform_0, window_bounds = array<i64: 8, 1024>}, {pipeline_mode = #tpu.pipeline_mode<synchronous>, transform_indices = @transform_1, window_bounds = array<i64: 1024, 128>}, {pipeline_mode = #tpu.pipeline_mode<synchronous>, transform_indices = @transform_2, window_bounds = array<i64: 1, 128>}, {pipeline_mode = #tpu.pipeline_mode<synchronous>, transform_indices = @transform_3, window_bounds = array<i64: 128, 128>}, {pipeline_mode = #tpu.pipeline_mode<synchronous>, transform_indices = @transform_4, window_bounds = array<i64: 1, 128>}, {transform_indices = @transform_5, window_bounds = array<i64: 8, 128>}]} {
    %c0 = arith.constant 0 : index
    %c0_0 = arith.constant 0 : index
    %0 = vector.load %arg1[%c0, %c0_0] : memref<8x1024xf32, #tpu.memory_space<vmem>>, vector<8x1024xf32>
    %c0_1 = arith.constant 0 : index
    %c0_2 = arith.constant 0 : index
    %1 = vector.load %arg2[%c0_1, %c0_2] : memref<1024x128xf32, #tpu.memory_space<vmem>>, vector<1024x128xf32>
    %cst = arith.constant dense<0.000000e+00> : vector<8x128xf32>
    %2 = tpu.matmul %0, %1, %cst {dimension_numbers = #tpu.dot_dimension_numbers<[1], [0], [0], [1], [0, 0, 1, 1], [], []>} : vector<8x1024xf32>, vector<1024x128xf32>, vector<8x128xf32> -> vector<8x128xf32>
    %c0_3 = arith.constant 0 : index
    %c0_4 = arith.constant 0 : index
    %3 = vector.load %arg3[%c0_3, %c0_4] : memref<1x128xf32, #tpu.memory_space<vmem>>, vector<1x128xf32>
    %4 = vector.broadcast %3 : vector<1x128xf32> to vector<8x128xf32>
    %5 = arith.addf %2, %4 : vector<8x128xf32>
    %cst_5 = arith.constant 0.000000e+00 : f32
    %6 = vector.broadcast %cst_5 : f32 to vector<8x128xf32>
    %7 = arith.maximumf %5, %6 : vector<8x128xf32>
    %c0_6 = arith.constant 0 : index
    %c0_7 = arith.constant 0 : index
    %8 = vector.load %arg4[%c0_6, %c0_7] : memref<128x128xf32, #tpu.memory_space<vmem>>, vector<128x128xf32>
    %cst_8 = arith.constant dense<0.000000e+00> : vector<8x128xf32>
    %9 = tpu.matmul %7, %8, %cst_8 {dimension_numbers = #tpu.dot_dimension_numbers<[1], [0], [0], [1], [0, 0, 1, 1], [], []>} : vector<8x128xf32>, vector<128x128xf32>, vector<8x128xf32> -> vector<8x128xf32>
    %c0_9 = arith.constant 0 : index
    %c0_10 = arith.constant 0 : index
    %10 = vector.load %arg5[%c0_9, %c0_10] : memref<1x128xf32, #tpu.memory_space<vmem>>, vector<1x128xf32>
    %11 = vector.broadcast %10 : vector<1x128xf32> to vector<8x128xf32>
    %12 = arith.addf %9, %11 : vector<8x128xf32>
    %c0_11 = arith.constant 0 : index
    %c0_12 = arith.constant 0 : index
    %13 = vector.load %arg6[%c0_11, %c0_12] : memref<8x128xf32, #tpu.memory_space<vmem>>, vector<8x128xf32>
    tpu.vector_store %arg6[%c0_11, %c0_12], %12 {strides = array<i32>} : memref<8x128xf32, #tpu.memory_space<vmem>>, vector<8x128xf32>,
    return
  }
  func.func @transform_0(%arg0: i32) -> (i32, i32) {
    %c0_i32 = arith.constant 0 : i32
    %c0_i32_0 = arith.constant 0 : i32
    return %arg0, %c0_i32 : i32, i32
  }
  func.func @transform_1(%arg0: i32) -> (i32, i32) {
    %c0_i32 = arith.constant 0 : i32
    %c0_i32_0 = arith.constant 0 : i32
    %c0_i32_1 = arith.constant 0 : i32
    return %c0_i32, %c0_i32_0 : i32, i32
  }
  func.func @transform_2(%arg0: i32) -> (i32, i32) {
    %c0_i32 = arith.constant 0 : i32
    %c0_i32_0 = arith.constant 0 : i32
    %c0_i32_1 = arith.constant 0 : i32
    return %c0_i32, %c0_i32_0 : i32, i32
  }
  func.func @transform_3(%arg0: i32) -> (i32, i32) {
    %c0_i32 = arith.constant 0 : i32
    %c0_i32_0 = arith.constant 0 : i32
    %c0_i32_1 = arith.constant 0 : i32
    return %c0_i32, %c0_i32_0 : i32, i32
  }
  func.func @transform_4(%arg0: i32) -> (i32, i32) {
    %c0_i32 = arith.constant 0 : i32
    %c0_i32_0 = arith.constant 0 : i32
    %c0_i32_1 = arith.constant 0 : i32
    return %c0_i32, %c0_i32_0 : i32, i32
  }
  func.func @transform_5(%arg0: i32) -> (i32, i32) {
    %c0_i32 = arith.constant 0 : i32
    %c0_i32_0 = arith.constant 0 : i32
    return %arg0, %c0_i32 : i32, i32
  }
}

</mosaic_0001>

<llo_original>
// kernel: mlp_forward.1
$region0: #{mlp_forward.1}
  #allocation0 [shape = 'u32[]', space=smem, size = 0x4, offset = 0x4, fixed_abs, tag = 'smem constant byte address 0x4 - core index']
  #allocation1 [shape = 'u32[144,128]{1,0:T(1,128)}', space=vmem, size = 0x12000, scoped, tag = 'internal scratch']
  %s0 = inlined_call_operand.vmem [shape: f32[8,1024], index: 0, kind: input, shape index: {}]
  %s1 = inlined_call_operand.vmem [shape: f32[1024,128], index: 1, kind: input, shape index: {}]
  %s2 = inlined_call_operand.vmem [shape: f32[1,128], index: 2, kind: input, shape index: {}]
  %s3 = inlined_call_operand.vmem [shape: f32[128,128], index: 3, kind: input, shape index: {}]
  %s4 = inlined_call_operand.vmem [shape: f32[1,128], index: 4, kind: input, shape index: {}]
  %s5 = inlined_call_operand.vmem [shape: f32[8,128], index: 5, kind: output, shape index: {}]
  %s6 = sld [smem:[#allocation0]]
  $region30: #{mlp_forward.1} parent=0
    _
  %s8 = ssub.s32 1, %s6
  %s9 = scalar_select 0, %s8, %s6
  // Predicated region
  $region2: #{mlp_forward.1} parent=0 // pred_check
    _
  $region3: #{mlp_forward.1} parent=0 // pred_check_branch
    %11 = sbr.rel (0) target = $region5
  $region4: #{mlp_forward.1} parent=0 // pred_region
    _
  $region5: #{mlp_forward.1} parent=0 // pred_fallthru
    _
  // Predicated region
  $region6: #{mlp_forward.1} parent=0 // pred_check
    _
  $region7: #{mlp_forward.1} parent=0 // pred_check_branch
    %13 = sbr.rel (0) target = $region9
  $region8: #{mlp_forward.1} parent=0 // pred_region
    _
  $region9: #{mlp_forward.1} parent=0 // pred_fallthru
    _
  // Predicated region
  $region10: #{mlp_forward.1} parent=0 // pred_check
    _
  $region11: #{mlp_forward.1} parent=0 // pred_check_branch
    %15 = sbr.rel (0) target = $region13
  $region12: #{mlp_forward.1} parent=0 // pred_region
    _
  $region13: #{mlp_forward.1} parent=0 // pred_fallthru
    _
  // Predicated region
  $region14: #{mlp_forward.1} parent=0 // pred_check
    _
  $region15: #{mlp_forward.1} parent=0 // pred_check_branch
    %17 = sbr.rel (0) target = $region17
  $region16: #{mlp_forward.1} parent=0 // pred_region
    _
  $region17: #{mlp_forward.1} parent=0 // pred_fallthru
    _
  // Predicated region
  $region18: #{mlp_forward.1} parent=0 // pred_check
    _
  $region19: #{mlp_forward.1} parent=0 // pred_check_branch
    %19 = sbr.rel (0) target = $region21
  $region20: #{mlp_forward.1} parent=0 // pred_region
    _
  $region21: #{mlp_forward.1} parent=0 // pred_fallthru
    _
  %v20 = vld [vmem:[%s0] sm:$0xff]
  %v21 = vld [vmem:[%s0 + $0x8] sm:$0xff]
  %v22 = vld [vmem:[%s0 + $0x10] sm:$0xff]
  %v23 = vld [vmem:[%s0 + $0x18] sm:$0xff]
  %v24 = vld [vmem:[%s0 + $0x20] sm:$0xff]
  %v25 = vld [vmem:[%s0 + $0x28] sm:$0xff]
  %v26 = vld [vmem:[%s0 + $0x30] sm:$0xff]
  %v27 = vld [vmem:[%s0 + $0x38] sm:$0xff]
  %v28 = vld [vmem:[%s1] sm:$0xff]
  %v29 = vld [vmem:[%s1 + $0x8] sm:$0xff]
  %v30 = vld [vmem:[%s1 + $0x10] sm:$0xff]
  %v31 = vld [vmem:[%s1 + $0x18] sm:$0xff]
  %v32 = vld [vmem:[%s1 + $0x20] sm:$0xff]
  %v33 = vld [vmem:[%s1 + $0x28] sm:$0xff]
  %v34 = vld [vmem:[%s1 + $0x30] sm:$0xff]
  %v35 = vld [vmem:[%s1 + $0x38] sm:$0xff]
  %v36 = vld [vmem:[%s1 + $0x40] sm:$0xff]
  %v37 = vld [vmem:[%s1 + $0x48] sm:$0xff]
  %v38 = vld [vmem:[%s1 + $0x50] sm:$0xff]
  %v39 = vld [vmem:[%s1 + $0x58] sm:$0xff]
  %v40 = vld [vmem:[%s1 + $0x60] sm:$0xff]
  %v41 = vld [vmem:[%s1 + $0x68] sm:$0xff]
  %v42 = vld [vmem:[%s1 + $0x70] sm:$0xff]
  %v43 = vld [vmem:[%s1 + $0x78] sm:$0xff]
  %v44 = vld [vmem:[%s1 + $0x80] sm:$0xff]
  %v45 = vld [vmem:[%s1 + $0x88] sm:$0xff]
  %v46 = vld [vmem:[%s1 + $0x90] sm:$0xff]
  %v47 = vld [vmem:[%s1 + $0x98] sm:$0xff]
  %v48 = vld [vmem:[%s1 + $0xa0] sm:$0xff]
  %v49 = vld [vmem:[%s1 + $0xa8] sm:$0xff]
  %v50 = vld [vmem:[%s1 + $0xb0] sm:$0xff]
  %v51 = vld [vmem:[%s1 + $0xb8] sm:$0xff]
  %v52 = vld [vmem:[%s1 + $0xc0] sm:$0xff]
  %v53 = vld [vmem:[%s1 + $0xc8] sm:$0xff]
  %v54 = vld [vmem:[%s1 + $0xd0] sm:$0xff]
  %v55 = vld [vmem:[%s1 + $0xd8] sm:$0xff]
  %v56 = vld [vmem:[%s1 + $0xe0] sm:$0xff]
  %v57 = vld [vmem:[%s1 + $0xe8] sm:$0xff]
  %v58 = vld [vmem:[%s1 + $0xf0] sm:$0xff]
  %v59 = vld [vmem:[%s1 + $0xf8] sm:$0xff]
  %v60 = vld [vmem:[%s1 + $0x100] sm:$0xff]
  %v61 = vld [vmem:[%s1 + $0x108] sm:$0xff]
  %v62 = vld [vmem:[%s1 + $0x110] sm:$0xff]
  %v63 = vld [vmem:[%s1 + $0x118] sm:$0xff]
  %v64 = vld [vmem:[%s1 + $0x120] sm:$0xff]
  %v65 = vld [vmem:[%s1 + $0x128] sm:$0xff]
  %v66 = vld [vmem:[%s1 + $0x130] sm:$0xff]
  %v67 = vld [vmem:[%s1 + $0x138] sm:$0xff]
  %v68 = vld [vmem:[%s1 + $0x140] sm:$0xff]
  %v69 = vld [vmem:[%s1 + $0x148] sm:$0xff]
  %v70 = vld [vmem:[%s1 + $0x150] sm:$0xff]
  %v71 = vld [vmem:[%s1 + $0x158] sm:$0xff]
  %v72 = vld [vmem:[%s1 + $0x160] sm:$0xff]
  %v73 = vld [vmem:[%s1 + $0x168] sm:$0xff]
  %v74 = vld [vmem:[%s1 + $0x170] sm:$0xff]
  %v75 = vld [vmem:[%s1 + $0x178] sm:$0xff]
  %v76 = vld [vmem:[%s1 + $0x180] sm:$0xff]
  %v77 = vld [vmem:[%s1 + $0x188] sm:$0xff]
  %v78 = vld [vmem:[%s1 + $0x190] sm:$0xff]
  %v79 = vld [vmem:[%s1 + $0x198] sm:$0xff]
  %v80 = vld [vmem:[%s1 + $0x1a0] sm:$0xff]
  %v81 = vld [vmem:[%s1 + $0x1a8] sm:$0xff]
  %v82 = vld [vmem:[%s1 + $0x1b0] sm:$0xff]
  %v83 = vld [vmem:[%s1 + $0x1b8] sm:$0xff]
  %v84 = vld [vmem:[%s1 + $0x1c0] sm:$0xff]
  %v85 = vld [vmem:[%s1 + $0x1c8] sm:$0xff]
  %v86 = vld [vmem:[%s1 + $0x1d0] sm:$0xff]
  %v87 = vld [vmem:[%s1 + $0x1d8] sm:$0xff]
  %v88 = vld [vmem:[%s1 + $0x1e0] sm:$0xff]
  %v89 = vld [vmem:[%s1 + $0x1e8] sm:$0xff]
  %v90 = vld [vmem:[%s1 + $0x1f0] sm:$0xff]
  %v91 = vld [vmem:[%s1 + $0x1f8] sm:$0xff]
  %v92 = vld [vmem:[%s1 + $0x200] sm:$0xff]
  %v93 = vld [vmem:[%s1 + $0x208] sm:$0xff]
  %v94 = vld [vmem:[%s1 + $0x210] sm:$0xff]
  %v95 = vld [vmem:[%s1 + $0x218] sm:$0xff]
  %v96 = vld [vmem:[%s1 + $0x220] sm:$0xff]
  %v97 = vld [vmem:[%s1 + $0x228] sm:$0xff]
  %v98 = vld [vmem:[%s1 + $0x230] sm:$0xff]
  %v99 = vld [vmem:[%s1 + $0x238] sm:$0xff]
  %v100 = vld [vmem:[%s1 + $0x240] sm:$0xff]
  %v101 = vld [vmem:[%s1 + $0x248] sm:$0xff]
  %v102 = vld [vmem:[%s1 + $0x250] sm:$0xff]
  %v103 = vld [vmem:[%s1 + $0x258] sm:$0xff]
  %v104 = vld [vmem:[%s1 + $0x260] sm:$0xff]
  %v105 = vld [vmem:[%s1 + $0x268] sm:$0xff]
  %v106 = vld [vmem:[%s1 + $0x270] sm:$0xff]
  %v107 = vld [vmem:[%s1 + $0x278] sm:$0xff]
  %v108 = vld [vmem:[%s1 + $0x280] sm:$0xff]
  %v109 = vld [vmem:[%s1 + $0x288] sm:$0xff]
  %v110 = vld [vmem:[%s1 + $0x290] sm:$0xff]
  %v111 = vld [vmem:[%s1 + $0x298] sm:$0xff]
  %v112 = vld [vmem:[%s1 + $0x2a0] sm:$0xff]
  %v113 = vld [vmem:[%s1 + $0x2a8] sm:$0xff]
  %v114 = vld [vmem:[%s1 + $0x2b0] sm:$0xff]
  %v115 = vld [vmem:[%s1 + $0x2b8] sm:$0xff]
  %v116 = vld [vmem:[%s1 + $0x2c0] sm:$0xff]
  %v117 = vld [vmem:[%s1 + $0x2c8] sm:$0xff]
  %v118 = vld [vmem:[%s1 + $0x2d0] sm:$0xff]
  %v119 = vld [vmem:[%s1 + $0x2d8] sm:$0xff]
  %v120 = vld [vmem:[%s1 + $0x2e0] sm:$0xff]
  %v121 = vld [vmem:[%s1 + $0x2e8] sm:$0xff]
  %v122 = vld [vmem:[%s1 + $0x2f0] sm:$0xff]
  %v123 = vld [vmem:[%s1 + $0x2f8] sm:$0xff]
  %v124 = vld [vmem:[%s1 + $0x300] sm:$0xff]
  %v125 = vld [vmem:[%s1 + $0x308] sm:$0xff]
  %v126 = vld [vmem:[%s1 + $0x310] sm:$0xff]
  %v127 = vld [vmem:[%s1 + $0x318] sm:$0xff]
  %v128 = vld [vmem:[%s1 + $0x320] sm:$0xff]
  %v129 = vld [vmem:[%s1 + $0x328] sm:$0xff]
  %v130 = vld [vmem:[%s1 + $0x330] sm:$0xff]
  %v131 = vld [vmem:[%s1 + $0x338] sm:$0xff]
  %v132 = vld [vmem:[%s1 + $0x340] sm:$0xff]
  %v133 = vld [vmem:[%s1 + $0x348] sm:$0xff]
  %v134 = vld [vmem:[%s1 + $0x350] sm:$0xff]
  %v135 = vld [vmem:[%s1 + $0x358] sm:$0xff]
  %v136 = vld [vmem:[%s1 + $0x360] sm:$0xff]
  %v137 = vld [vmem:[%s1 + $0x368] sm:$0xff]
  %v138 = vld [vmem:[%s1 + $0x370] sm:$0xff]
  %v139 = vld [vmem:[%s1 + $0x378] sm:$0xff]
  %v140 = vld [vmem:[%s1 + $0x380] sm:$0xff]
  %v141 = vld [vmem:[%s1 + $0x388] sm:$0xff]
  %v142 = vld [vmem:[%s1 + $0x390] sm:$0xff]
  %v143 = vld [vmem:[%s1 + $0x398] sm:$0xff]
  %v144 = vld [vmem:[%s1 + $0x3a0] sm:$0xff]
  %v145 = vld [vmem:[%s1 + $0x3a8] sm:$0xff]
  %v146 = vld [vmem:[%s1 + $0x3b0] sm:$0xff]
  %v147 = vld [vmem:[%s1 + $0x3b8] sm:$0xff]
  %v148 = vld [vmem:[%s1 + $0x3c0] sm:$0xff]
  %v149 = vld [vmem:[%s1 + $0x3c8] sm:$0xff]
  %v150 = vld [vmem:[%s1 + $0x3d0] sm:$0xff]
  %v151 = vld [vmem:[%s1 + $0x3d8] sm:$0xff]
  %v152 = vld [vmem:[%s1 + $0x3e0] sm:$0xff]
  %v153 = vld [vmem:[%s1 + $0x3e8] sm:$0xff]
  %v154 = vld [vmem:[%s1 + $0x3f0] sm:$0xff]
  %v155 = vld [vmem:[%s1 + $0x3f8] sm:$0xff]
  %v156 = vld [vmem:[%s2] sm:$0x1]
  %v158 = vlaneseq
  %v159 = vshrl.u32 %v158, 7
  %v160 = vsub.s32 0, %v159
  %v161 = vrot.slane %v156, %v160
  %163 = vmatprep.subr.mxu0 0.0
  %164 = vmatpush1.msra.mxu0 %v28
  %165 = vmatprep.subr.mxu0 0.0
  %166 = vmatpush1.msra.mxu0 %v29
  %167 = vmatprep.subr.mxu0 0.0
  %168 = vmatpush1.msra.mxu0 %v30
  %169 = vmatprep.subr.mxu0 0.0
  %170 = vmatpush1.msra.mxu0 %v31
  %171 = vmatprep.subr.mxu0 0.0
  %172 = vmatpush1.msra.mxu0 %v32
  %173 = vmatprep.subr.mxu0 0.0
  %174 = vmatpush1.msra.mxu0 %v33
  %175 = vmatprep.subr.mxu0 0.0
  %176 = vmatpush1.msra.mxu0 %v34
  %177 = vmatprep.subr.mxu0 0.0
  %178 = vmatpush1.msra.mxu0 %v35
  %179 = vmatprep.subr.mxu0 0.0
  %180 = vmatpush1.msra.mxu0 %v36
  %181 = vmatprep.subr.mxu0 0.0
  %182 = vmatpush1.msra.mxu0 %v37
  %183 = vmatprep.subr.mxu0 0.0
  %184 = vmatpush1.msra.mxu0 %v38
  %185 = vmatprep.subr.mxu0 0.0
  %186 = vmatpush1.msra.mxu0 %v39
  %187 = vmatprep.subr.mxu0 0.0
  %188 = vmatpush1.msra.mxu0 %v40
  %189 = vmatprep.subr.mxu0 0.0
  %190 = vmatpush1.msra.mxu0 %v41
  %191 = vmatprep.subr.mxu0 0.0
  %192 = vmatpush1.msra.mxu0 %v42
  %193 = vmatprep.subr.mxu0 0.0
  %194 = vmatpush1.msra.mxu0 %v43
  %195 = vmatprep.subr.mxu0 0.0
  %196 = vmatpush1.msra.mxu0 %v44
  %197 = vmatprep.subr.mxu0 0.0
  %198 = vmatpush1.msra.mxu0 %v45
  %199 = vmatprep.subr.mxu0 0.0
  %200 = vmatpush1.msra.mxu0 %v46
  %201 = vmatprep.subr.mxu0 0.0
  %202 = vmatpush1.msra.mxu0 %v47
  %203 = vmatprep.subr.mxu0 0.0
  %204 = vmatpush1.msra.mxu0 %v48
  %205 = vmatprep.subr.mxu0 0.0
  %206 = vmatpush1.msra.mxu0 %v49
  %207 = vmatprep.subr.mxu0 0.0
  %208 = vmatpush1.msra.mxu0 %v50
  %209 = vmatprep.subr.mxu0 0.0
  %210 = vmatpush1.msra.mxu0 %v51
  %211 = vmatprep.subr.mxu0 0.0
  %212 = vmatpush1.msra.mxu0 %v52
  %213 = vmatprep.subr.mxu0 0.0
  %214 = vmatpush1.msra.mxu0 %v53
  %215 = vmatprep.subr.mxu0 0.0
  %216 = vmatpush1.msra.mxu0 %v54
  %217 = vmatprep.subr.mxu0 0.0
  %218 = vmatpush1.msra.mxu0 %v55
  %219 = vmatprep.subr.mxu0 0.0
  %220 = vmatpush1.msra.mxu0 %v56
  %221 = vmatprep.subr.mxu0 0.0
  %222 = vmatpush1.msra.mxu0 %v57
  %223 = vmatprep.subr.mxu0 0.0
  %224 = vmatpush1.msra.mxu0 %v58
  %225 = vmatprep.subr.mxu0 0.0
  %226 = vmatpush1.msra.mxu0 %v59
  %227 = vmatprep.mubr.f32.mxu0 %v21
  %228 = vmatmul.mubr.f32.gmra.mrb[0].mxu0 %v20
  %v229 = vpop.f32.mrb[0].mxu0
  %v230 = vadd.f32 %v161, %v229
  %v231 = vpop.f32.mrb[0].mxu0
  %232 = vdwg.mxu0
  %233 = vmatprep.subr.mxu0 0.0
  %234 = vmatpush1.msra.mxu0 %v60
  %235 = vmatprep.subr.mxu0 0.0
  %236 = vmatpush1.msra.mxu0 %v61
  %237 = vmatprep.subr.mxu0 0.0
  %238 = vmatpush1.msra.mxu0 %v62
  %239 = vmatprep.subr.mxu0 0.0
  %240 = vmatpush1.msra.mxu0 %v63
  %241 = vmatprep.subr.mxu0 0.0
  %242 = vmatpush1.msra.mxu0 %v64
  %243 = vmatprep.subr.mxu0 0.0
  %244 = vmatpush1.msra.mxu0 %v65
  %245 = vmatprep.subr.mxu0 0.0
  %246 = vmatpush1.msra.mxu0 %v66
  %247 = vmatprep.subr.mxu0 0.0
  %248 = vmatpush1.msra.mxu0 %v67
  %249 = vmatprep.subr.mxu0 0.0
  %250 = vmatpush1.msra.mxu0 %v68
  %251 = vmatprep.subr.mxu0 0.0
  %252 = vmatpush1.msra.mxu0 %v69
  %253 = vmatprep.subr.mxu0 0.0
  %254 = vmatpush1.msra.mxu0 %v70
  %255 = vmatprep.subr.mxu0 0.0
  %256 = vmatpush1.msra.mxu0 %v71
  %257 = vmatprep.subr.mxu0 0.0
  %258 = vmatpush1.msra.mxu0 %v72
  %259 = vmatprep.subr.mxu0 0.0
  %260 = vmatpush1.msra.mxu0 %v73
  %261 = vmatprep.subr.mxu0 0.0
  %262 = vmatpush1.msra.mxu0 %v74
  %263 = vmatprep.subr.mxu0 0.0
  %264 = vmatpush1.msra.mxu0 %v75
  %265 = vmatprep.subr.mxu0 0.0
  %266 = vmatpush1.msra.mxu0 %v76
  %267 = vmatprep.subr.mxu0 0.0
  %268 = vmatpush1.msra.mxu0 %v77
  %269 = vmatprep.subr.mxu0 0.0
  %270 = vmatpush1.msra.mxu0 %v78
  %271 = vmatprep.subr.mxu0 0.0
  %272 = vmatpush1.msra.mxu0 %v79
  %273 = vmatprep.subr.mxu0 0.0
  %274 = vmatpush1.msra.mxu0 %v80
  %275 = vmatprep.subr.mxu0 0.0
  %276 = vmatpush1.msra.mxu0 %v81
  %277 = vmatprep.subr.mxu0 0.0
  %278 = vmatpush1.msra.mxu0 %v82
  %279 = vmatprep.subr.mxu0 0.0
  %280 = vmatpush1.msra.mxu0 %v83
  %281 = vmatprep.subr.mxu0 0.0
  %282 = vmatpush1.msra.mxu0 %v84
  %283 = vmatprep.subr.mxu0 0.0
  %284 = vmatpush1.msra.mxu0 %v85
  %285 = vmatprep.subr.mxu0 0.0
  %286 = vmatpush1.msra.mxu0 %v86
  %287 = vmatprep.subr.mxu0 0.0
  %288 = vmatpush1.msra.mxu0 %v87
  %289 = vmatprep.subr.mxu0 0.0
  %290 = vmatpush1.msra.mxu0 %v88
  %291 = vmatprep.subr.mxu0 0.0
  %292 = vmatpush1.msra.mxu0 %v89
  %293 = vmatprep.subr.mxu0 0.0
  %294 = vmatpush1.msra.mxu0 %v90
  %295 = vmatprep.subr.mxu0 0.0
  %296 = vmatpush1.msra.mxu0 %v91
  %297 = vmatprep.mubr.f32.mxu0 %v23
  %298 = vmatmul.mubr.f32.gmra.mrb[0].mxu0 %v22
  %v299 = vpop.f32.mrb[0].mxu0
  %v300 = vadd.f32 %v230, %v299
  %v301 = vpop.f32.mrb[0].mxu0
  %302 = vdwg.mxu0
  %303 = vmatprep.subr.mxu0 0.0
  %304 = vmatpush1.msra.mxu0 %v92
  %305 = vmatprep.subr.mxu0 0.0
  %306 = vmatpush1.msra.mxu0 %v93
  %307 = vmatprep.subr.mxu0 0.0
  %308 = vmatpush1.msra.mxu0 %v94
  %309 = vmatprep.subr.mxu0 0.0
  %310 = vmatpush1.msra.mxu0 %v95
  %311 = vmatprep.subr.mxu0 0.0
  %312 = vmatpush1.msra.mxu0 %v96
  %313 = vmatprep.subr.mxu0 0.0
  %314 = vmatpush1.msra.mxu0 %v97
  %315 = vmatprep.subr.mxu0 0.0
  %316 = vmatpush1.msra.mxu0 %v98
  %317 = vmatprep.subr.mxu0 0.0
  %318 = vmatpush1.msra.mxu0 %v99
  %319 = vmatprep.subr.mxu0 0.0
  %320 = vmatpush1.msra.mxu0 %v100
  %321 = vmatprep.subr.mxu0 0.0
  %322 = vmatpush1.msra.mxu0 %v101
  %323 = vmatprep.subr.mxu0 0.0
  %324 = vmatpush1.msra.mxu0 %v102
  %325 = vmatprep.subr.mxu0 0.0
  %326 = vmatpush1.msra.mxu0 %v103
  %327 = vmatprep.subr.mxu0 0.0
  %328 = vmatpush1.msra.mxu0 %v104
  %329 = vmatprep.subr.mxu0 0.0
  %330 = vmatpush1.msra.mxu0 %v105
  %331 = vmatprep.subr.mxu0 0.0
  %332 = vmatpush1.msra.mxu0 %v106
  %333 = vmatprep.subr.mxu0 0.0
  %334 = vmatpush1.msra.mxu0 %v107
  %335 = vmatprep.subr.mxu0 0.0
  %336 = vmatpush1.msra.mxu0 %v108
  %337 = vmatprep.subr.mxu0 0.0
  %338 = vmatpush1.msra.mxu0 %v109
  %339 = vmatprep.subr.mxu0 0.0
  %340 = vmatpush1.msra.mxu0 %v110
  %341 = vmatprep.subr.mxu0 0.0
  %342 = vmatpush1.msra.mxu0 %v111
  %343 = vmatprep.subr.mxu0 0.0
  %344 = vmatpush1.msra.mxu0 %v112
  %345 = vmatprep.subr.mxu0 0.0
  %346 = vmatpush1.msra.mxu0 %v113
  %347 = vmatprep.subr.mxu0 0.0
  %348 = vmatpush1.msra.mxu0 %v114
  %349 = vmatprep.subr.mxu0 0.0
  %350 = vmatpush1.msra.mxu0 %v115
  %351 = vmatprep.subr.mxu0 0.0
  %352 = vmatpush1.msra.mxu0 %v116
  %353 = vmatprep.subr.mxu0 0.0
  %354 = vmatpush1.msra.mxu0 %v117
  %355 = vmatprep.subr.mxu0 0.0
  %356 = vmatpush1.msra.mxu0 %v118
  %357 = vmatprep.subr.mxu0 0.0
  %358 = vmatpush1.msra.mxu0 %v119
  %359 = vmatprep.subr.mxu0 0.0
  %360 = vmatpush1.msra.mxu0 %v120
  %361 = vmatprep.subr.mxu0 0.0
  %362 = vmatpush1.msra.mxu0 %v121
  %363 = vmatprep.subr.mxu0 0.0
  %364 = vmatpush1.msra.mxu0 %v122
  %365 = vmatprep.subr.mxu0 0.0
  %366 = vmatpush1.msra.mxu0 %v123
  %367 = vmatprep.mubr.f32.mxu0 %v25
  %368 = vmatmul.mubr.f32.gmra.mrb[0].mxu0 %v24
  %v369 = vpop.f32.mrb[0].mxu0
  %v370 = vadd.f32 %v300, %v369
  %v371 = vpop.f32.mrb[0].mxu0
  %372 = vdwg.mxu0
  %373 = vmatprep.subr.mxu0 0.0
  %374 = vmatpush1.msra.mxu0 %v124
  %375 = vmatprep.subr.mxu0 0.0
  %376 = vmatpush1.msra.mxu0 %v125
  %377 = vmatprep.subr.mxu0 0.0
  %378 = vmatpush1.msra.mxu0 %v126
  %379 = vmatprep.subr.mxu0 0.0
  %380 = vmatpush1.msra.mxu0 %v127
  %381 = vmatprep.subr.mxu0 0.0
  %382 = vmatpush1.msra.mxu0 %v128
  %383 = vmatprep.subr.mxu0 0.0
  %384 = vmatpush1.msra.mxu0 %v129
  %385 = vmatprep.subr.mxu0 0.0
  %386 = vmatpush1.msra.mxu0 %v130
  %387 = vmatprep.subr.mxu0 0.0
  %388 = vmatpush1.msra.mxu0 %v131
  %389 = vmatprep.subr.mxu0 0.0
  %390 = vmatpush1.msra.mxu0 %v132
  %391 = vmatprep.subr.mxu0 0.0
  %392 = vmatpush1.msra.mxu0 %v133
  %393 = vmatprep.subr.mxu0 0.0
  %394 = vmatpush1.msra.mxu0 %v134
  %395 = vmatprep.subr.mxu0 0.0
  %396 = vmatpush1.msra.mxu0 %v135
  %397 = vmatprep.subr.mxu0 0.0
  %398 = vmatpush1.msra.mxu0 %v136
  %399 = vmatprep.subr.mxu0 0.0
  %400 = vmatpush1.msra.mxu0 %v137
  %401 = vmatprep.subr.mxu0 0.0
  %402 = vmatpush1.msra.mxu0 %v138
  %403 = vmatprep.subr.mxu0 0.0
  %404 = vmatpush1.msra.mxu0 %v139
  %405 = vmatprep.subr.mxu0 0.0
  %406 = vmatpush1.msra.mxu0 %v140
  %407 = vmatprep.subr.mxu0 0.0
  %408 = vmatpush1.msra.mxu0 %v141
  %409 = vmatprep.subr.mxu0 0.0
  %410 = vmatpush1.msra.mxu0 %v142
  %411 = vmatprep.subr.mxu0 0.0
  %412 = vmatpush1.msra.mxu0 %v143
  %413 = vmatprep.subr.mxu0 0.0
  %414 = vmatpush1.msra.mxu0 %v144
  %415 = vmatprep.subr.mxu0 0.0
  %416 = vmatpush1.msra.mxu0 %v145
  %417 = vmatprep.subr.mxu0 0.0
  %418 = vmatpush1.msra.mxu0 %v146
  %419 = vmatprep.subr.mxu0 0.0
  %420 = vmatpush1.msra.mxu0 %v147
  %421 = vmatprep.subr.mxu0 0.0
  %422 = vmatpush1.msra.mxu0 %v148
  %423 = vmatprep.subr.mxu0 0.0
  %424 = vmatpush1.msra.mxu0 %v149
  %425 = vmatprep.subr.mxu0 0.0
  %426 = vmatpush1.msra.mxu0 %v150
  %427 = vmatprep.subr.mxu0 0.0
  %428 = vmatpush1.msra.mxu0 %v151
  %429 = vmatprep.subr.mxu0 0.0
  %430 = vmatpush1.msra.mxu0 %v152
  %431 = vmatprep.subr.mxu0 0.0
  %432 = vmatpush1.msra.mxu0 %v153
  %433 = vmatprep.subr.mxu0 0.0
  %434 = vmatpush1.msra.mxu0 %v154
  %435 = vmatprep.subr.mxu0 0.0
  %436 = vmatpush1.msra.mxu0 %v155
  %437 = vmatprep.mubr.f32.mxu0 %v27
  %438 = vmatmul.mubr.f32.gmra.mrb[0].mxu0 %v26
  %v439 = vpop.f32.mrb[0].mxu0
  %v440 = vadd.f32 %v370, %v439
  %v441 = vpop.f32.mrb[0].mxu0
  %442 = vdwg.mxu0
  %v443 = vmax.f32 %v440, 0.0
  %v444 = vld [vmem:[%s3] sm:$0xff]
  %v445 = vld [vmem:[%s3 + $0x8] sm:$0xff]
  %v446 = vld [vmem:[%s3 + $0x10] sm:$0xff]
  %v447 = vld [vmem:[%s3 + $0x18] sm:$0xff]
  %v448 = vld [vmem:[%s3 + $0x20] sm:$0xff]
  %v449 = vld [vmem:[%s3 + $0x28] sm:$0xff]
  %v450 = vld [vmem:[%s3 + $0x30] sm:$0xff]
  %v451 = vld [vmem:[%s3 + $0x38] sm:$0xff]
  %v452 = vld [vmem:[%s3 + $0x40] sm:$0xff]
  %v453 = vld [vmem:[%s3 + $0x48] sm:$0xff]
  %v454 = vld [vmem:[%s3 + $0x50] sm:$0xff]
  %v455 = vld [vmem:[%s3 + $0x58] sm:$0xff]
  %v456 = vld [vmem:[%s3 + $0x60] sm:$0xff]
  %v457 = vld [vmem:[%s3 + $0x68] sm:$0xff]
  %v458 = vld [vmem:[%s3 + $0x70] sm:$0xff]
  %v459 = vld [vmem:[%s3 + $0x78] sm:$0xff]
  %v460 = vld [vmem:[%s4] sm:$0x1]
  %v462 = vlaneseq
  %v463 = vshrl.u32 %v462, 7
  %v464 = vsub.s32 0, %v463
  %v465 = vrot.slane %v460, %v464
  %467 = vmatprep.subr.mxu0 0.0
  %468 = vmatpush1.msra.mxu0 %v444
  %469 = vmatprep.subr.mxu0 0.0
  %470 = vmatpush1.msra.mxu0 %v445
  %471 = vmatprep.subr.mxu0 0.0
  %472 = vmatpush1.msra.mxu0 %v446
  %473 = vmatprep.subr.mxu0 0.0
  %474 = vmatpush1.msra.mxu0 %v447
  %475 = vmatprep.subr.mxu0 0.0
  %476 = vmatpush1.msra.mxu0 %v448
  %477 = vmatprep.subr.mxu0 0.0
  %478 = vmatpush1.msra.mxu0 %v449
  %479 = vmatprep.subr.mxu0 0.0
  %480 = vmatpush1.msra.mxu0 %v450
  %481 = vmatprep.subr.mxu0 0.0
  %482 = vmatpush1.msra.mxu0 %v451
  %483 = vmatprep.subr.mxu0 0.0
  %484 = vmatpush1.msra.mxu0 %v452
  %485 = vmatprep.subr.mxu0 0.0
  %486 = vmatpush1.msra.mxu0 %v453
  %487 = vmatprep.subr.mxu0 0.0
  %488 = vmatpush1.msra.mxu0 %v454
  %489 = vmatprep.subr.mxu0 0.0
  %490 = vmatpush1.msra.mxu0 %v455
  %491 = vmatprep.subr.mxu0 0.0
  %492 = vmatpush1.msra.mxu0 %v456
  %493 = vmatprep.subr.mxu0 0.0
  %494 = vmatpush1.msra.mxu0 %v457
  %495 = vmatprep.subr.mxu0 0.0
  %496 = vmatpush1.msra.mxu0 %v458
  %497 = vmatprep.subr.mxu0 0.0
  %498 = vmatpush1.msra.mxu0 %v459
  %499 = vmatprep.subr.mxu0 0.0
  %500 = vmatpush1.msra.mxu0 0.0
  %501 = vmatprep.subr.mxu0 0.0
  %502 = vmatpush1.msra.mxu0 0.0
  %503 = vmatprep.subr.mxu0 0.0
  %504 = vmatpush1.msra.mxu0 0.0
  %505 = vmatprep.subr.mxu0 0.0
  %506 = vmatpush1.msra.mxu0 0.0
  %507 = vmatprep.subr.mxu0 0.0
  %508 = vmatpush1.msra.mxu0 0.0
  %509 = vmatprep.subr.mxu0 0.0
  %510 = vmatpush1.msra.mxu0 0.0
  %511 = vmatprep.subr.mxu0 0.0
  %512 = vmatpush1.msra.mxu0 0.0
  %513 = vmatprep.subr.mxu0 0.0
  %514 = vmatpush1.msra.mxu0 0.0
  %515 = vmatprep.subr.mxu0 0.0
  %516 = vmatpush1.msra.mxu0 0.0
  %517 = vmatprep.subr.mxu0 0.0
  %518 = vmatpush1.msra.mxu0 0.0
  %519 = vmatprep.subr.mxu0 0.0
  %520 = vmatpush1.msra.mxu0 0.0
  %521 = vmatprep.subr.mxu0 0.0
  %522 = vmatpush1.msra.mxu0 0.0
  %523 = vmatprep.subr.mxu0 0.0
  %524 = vmatpush1.msra.mxu0 0.0
  %525 = vmatprep.subr.mxu0 0.0
  %526 = vmatpush1.msra.mxu0 0.0
  %527 = vmatprep.subr.mxu0 0.0
  %528 = vmatpush1.msra.mxu0 0.0
  %529 = vmatprep.subr.mxu0 0.0
  %530 = vmatpush1.msra.mxu0 0.0
  %531 = vmatprep.mubr.f32.mxu0 0.0
  %532 = vmatmul.mubr.f32.gmra.mrb[0].mxu0 %v443
  %v533 = vpop.f32.mrb[0].mxu0
  %v534 = vadd.f32 %v465, %v533
  %v535 = vpop.f32.mrb[0].mxu0
  %536 = vdwg.mxu0
  %537 = vst [vmem:[%s5] sm:$0xff] %v534
  // Predicated region
  $region22: #{mlp_forward.1} parent=0 // pred_check
    _
  $region23: #{mlp_forward.1} parent=0 // pred_check_branch
    %539 = sbr.rel (0) target = $region25
  $region24: #{mlp_forward.1} parent=0 // pred_region
    _
  $region25: #{mlp_forward.1} parent=0 // pred_fallthru
    _
  // Predicated region
  $region26: #{mlp_forward.1} parent=0 // pred_check
    _
  $region27: #{mlp_forward.1} parent=0 // pred_check_branch
    %541 = sbr.rel (0) target = $region29
  $region28: #{mlp_forward.1} parent=0 // pred_region
    _
  $region29: #{mlp_forward.1} parent=0 // pred_fallthru
    _

</llo_original>
